<compile_context>
chip_gen: v7x
topology: tpu7x:2x2x1
jax: 0.10.0
libtpu: 0.0.40
codegen_flags: <defaults>
</compile_context>

<pallas_src>
import jax
import jax.numpy as jnp
from jax.experimental import pallas as pl
from jax.experimental.pallas import tpu as pltpu

EPS = 1e-5
KH = KW = 3
LANE = 128


def _round_up(x, m):
    return ((x + m - 1) // m) * m


def _vmem_limit_bytes():
    """~75% of physical VMEM: ~96 MiB on v5e/v6e (128 MiB), ~48 MiB on v7x (64 MiB)."""
    cap = 128 * 1024 * 1024
    try:
        cap = int(pltpu.get_tpu_info().vmem_capacity_bytes)
    except Exception:
        pass
    return max(32 * 1024 * 1024, min(cap * 3 // 4, 100 * 1024 * 1024))


def _pick_phase1_tm(m, kpad, tn, itemsize, vmem_limit, max_rows=2048):
    """Largest row-tile dividing M (multiple of 16, then 8) that fits the VMEM budget."""
    budget = vmem_limit // 2

    def fits(t):
        per_step = (t * kpad + kpad * tn + t * tn) * itemsize + 2 * tn * 4
        return 2 * per_step <= budget  # double-buffered pipeline

    best = None
    for step in (16, 8):
        for t in range(step, min(m, max_rows) + 1, step):
            if m % t == 0 and fits(t):
                best = t
        if best is not None:
            return best
    return m  # full-M block (equal-to-full-dim is always legal)


def _pick_phase2_tm(hw, cpad, cout, vmem_limit, max_rows=4096):
    """Largest 128-multiple row-tile dividing H*W that fits the VMEM budget."""
    budget = vmem_limit // 2

    def fits(t):
        per_step = (t * cpad + cout * t + 2 * cpad) * 4
        return 2 * per_step <= budget

    best = None
    for t in range(LANE, min(hw, max_rows) + 1, LANE):
        if hw % t == 0 and fits(t):
            best = t
    return best if best is not None else hw


def _conv_stats_kernel(p_ref, w_ref, y_ref, stats_ref):
    """One MXU dot per (row-tile, cout-tile) + per-tile BN partial statistics.

    p_ref:     (TM, Kpad)   im2col patches (compute dtype, lane-dense)
    w_ref:     (Kpad, TN)   folded 3x3 weights (compute dtype)
    y_ref:     (TM, TN)     conv output tile (compute-dtype slab)
    stats_ref: (1, 2, TN)   this tile's [sum, sum_of_squares] partials (f32)
    """
    y = jnp.dot(p_ref[...], w_ref[...], preferred_element_type=jnp.float32)
    y_ref[...] = y.astype(y_ref.dtype)

    # Row reductions on the MXU (two M=1 dots) instead of VPU axis-0 sums.
    ones = jnp.ones((1, y.shape[0]), jnp.float32)
    s1 = jnp.dot(ones, y, preferred_element_type=jnp.float32)        # (1, TN)
    s2 = jnp.dot(ones, y * y, preferred_element_type=jnp.float32)    # (1, TN)
    stats_ref[...] = jnp.concatenate([s1, s2], axis=0)[None]


def _bn_apply_t_kernel(y_ref, scale_ref, shift_ref, o_ref):
    """Fused normalize+affine + NHWC->NCHW transpose (lane-dense output stores).

    y_ref:     (1, TM2, Cpad)  conv slab block (compute dtype)
    scale_ref: (1, Cpad)       gamma * rsqrt(var + eps)               (f32)
    shift_ref: (1, Cpad)       beta - mean * scale                    (f32)
    o_ref:     (1, Cout, TM2)  NCHW-flat output block                 (f32)
    """
    cout = o_ref.shape[1]
    y = y_ref[0].astype(jnp.float32) * scale_ref[...] + shift_ref[...]   # (TM2, Cpad)
    o_ref[...] = jnp.transpose(y)[:cout, :][None]                        # XLU transpose


def conv_bn_forward(x_nchw, weight_oihw, bias, gamma, beta, *,
                    compute_dtype=jnp.bfloat16):
    """Conv2d(Cin, Cout, 3, padding=1) + BatchNorm2d(Cout) with training-mode batch stats.

    x_nchw: (N, Cin, H, W) f32; weight_oihw: (Cout, Cin, 3, 3); bias/gamma/beta: (Cout,).
    Returns (N, Cout, H, W) f32.
    """
    del bias  # exactly cancelled by the training-mode batch-norm mean subtraction
    n, cin, h, w = x_nchw.shape
    cout = weight_oihw.shape[0]
    m = n * h * w
    hw = h * w
    k = KH * KW * cin
    kpad = _round_up(k, LANE)
    cpad = _round_up(cout, LANE)
    vmem_limit = _vmem_limit_bytes()
    itemsize = jnp.dtype(compute_dtype).itemsize

    # ---- im2col once in the wrapper (layout plumbing, not compute) --------------------
    x = jnp.transpose(x_nchw, (0, 2, 3, 1)).astype(jnp.float32)          # NHWC
    x_pad = jnp.pad(x, ((0, 0), (1, 1), (1, 1), (0, 0)))
    taps = [x_pad[:, kh:kh + h, kw:kw + w, :]
            for kh in range(KH) for kw in range(KW)]
    patches = jnp.concatenate(taps, axis=-1).reshape(m, k)               # (M, 9*Cin)
    patches = jnp.pad(patches, ((0, 0), (0, kpad - k))).astype(compute_dtype)

    # (Cout, Cin, 3, 3) -> (KH*KW*Cin, Cout), zero-padded to (Kpad, Cpad); tap order
    # matches the wrapper im2col (kh outer, kw, cin inner).
    w_mat = jnp.transpose(weight_oihw, (2, 3, 1, 0)).astype(jnp.float32).reshape(k, cout)
    w_mat = jnp.pad(w_mat, ((0, kpad - k), (0, cpad - cout))).astype(compute_dtype)

    # 256-lane output tiles keep the v6e/v7x MXU full while bounding the weight block;
    # 128 otherwise (native width on v5e, and trivially for small Cout).
    tn = 256 if cpad % 256 == 0 else LANE
    tm = _pick_phase1_tm(m, kpad, tn, itemsize, vmem_limit)

    # ---- Phase 1: conv as a tiled matmul + per-tile BN partial stats -------------------
    # Grid order (m-tiles, cout-tiles): patches block stays resident across the inner
    # cout axis.  Per-tile partial stats -> both axes fully "parallel" (2-TC friendly).
    y_slab, stats = pl.pallas_call(
        _conv_stats_kernel,
        out_shape=(
            jax.ShapeDtypeStruct((m, cpad), compute_dtype),
            jax.ShapeDtypeStruct((m // tm, 2, cpad), jnp.float32),
        ),
        grid=(m // tm, cpad // tn),
        in_specs=[
            pl.BlockSpec((tm, kpad), lambda i, j: (i, 0)),
            pl.BlockSpec((kpad, tn), lambda i, j: (0, j)),
        ],
        out_specs=(
            pl.BlockSpec((tm, tn), lambda i, j: (i, j)),
            pl.BlockSpec((1, 2, tn), lambda i, j: (i, 0, j)),
        ),
        compiler_params=pltpu.CompilerParams(
            dimension_semantics=("parallel", "parallel"),
            vmem_limit_bytes=vmem_limit),
    )(patches, w_mat)

    # ---- BN finalization (tiny per-channel math in the wrapper) ------------------------
    # TODO(synk): one-pass var = E[y^2] - E[y]^2 can cancel when |mean| >> std; switch to
    # centered per-tile partials if that ever matters.  Running-stat buffers (PyTorch
    # running_mean/var updates) are not produced.
    tot = jnp.sum(stats, axis=0)                                         # (2, Cpad)
    mean = tot[0] / m
    var = jnp.maximum(tot[1] / m - mean * mean, 0.0)                     # biased (training)
    scale_c = gamma.astype(jnp.float32) * jax.lax.rsqrt(var[:cout] + EPS)
    shift_c = beta.astype(jnp.float32) - mean[:cout] * scale_c
    scale = jnp.zeros((1, cpad), jnp.float32).at[0, :cout].set(scale_c)
    shift = jnp.zeros((1, cpad), jnp.float32).at[0, :cout].set(shift_c)

    # ---- Phase 2: fused normalize + affine + NHWC->NCHW transpose ----------------------
    tm2 = _pick_phase2_tm(hw, cpad, cout, vmem_limit)
    out = pl.pallas_call(
        _bn_apply_t_kernel,
        out_shape=jax.ShapeDtypeStruct((n, cout, hw), jnp.float32),
        grid=(n, hw // tm2),
        in_specs=[
            pl.BlockSpec((1, tm2, cpad), lambda i, j: (i, j, 0)),
            pl.BlockSpec((1, cpad), lambda i, j: (0, 0)),
            pl.BlockSpec((1, cpad), lambda i, j: (0, 0)),
        ],
        out_specs=pl.BlockSpec((1, cout, tm2), lambda i, j: (i, 0, j)),
        compiler_params=pltpu.CompilerParams(
            dimension_semantics=("parallel", "parallel"),
            vmem_limit_bytes=vmem_limit),
    )(y_slab.reshape(n, hw, cpad), scale, shift)

    return out.reshape(n, cout, h, w)                                    # NCHW, free reshape


def _reference(x, w, b, g, beta):
    y = jax.lax.conv_general_dilated(
        x, w, window_strides=(1, 1), padding="SAME",
        dimension_numbers=("NCHW", "OIHW", "NCHW"))
    y = y + b[None, :, None, None]
    mean = y.mean(axis=(0, 2, 3), keepdims=True)
    var = ((y - mean) ** 2).mean(axis=(0, 2, 3), keepdims=True)
    return (g[None, :, None, None] * (y - mean) / jnp.sqrt(var + EPS)
            + beta[None, :, None, None])


if __name__ == "__main__":
    key = jax.random.PRNGKey(0)
    k1, k2, k3, k4, k5 = jax.random.split(key, 5)

    N, Cin, Cout, H, W = 2, 4, 8, 16, 16

    x = jax.random.normal(k1, (N, Cin, H, W), dtype=jnp.float32)
    weight = 0.1 * jax.random.normal(k2, (Cout, Cin, KH, KW), dtype=jnp.float32)
    bias = 0.05 * jax.random.normal(k3, (Cout,), dtype=jnp.float32)
    # Non-trivial BN affine to exercise the fused scale/shift path.
    gamma = 1.0 + 0.1 * jax.random.normal(k4, (Cout,), dtype=jnp.float32)
    beta = 0.1 * jax.random.normal(k5, (Cout,), dtype=jnp.float32)

    ref = _reference(x, weight, bias, gamma, beta)

    # Exact-dtype run (f32 matmuls) to validate the kernel structure tightly.
    out_f32 = jax.block_until_ready(
        conv_bn_forward(x, weight, bias, gamma, beta, compute_dtype=jnp.float32))
    assert out_f32.shape == (N, Cout, H, W)
    assert jnp.allclose(out_f32, ref, atol=1e-4, rtol=1e-4), (
        f"f32 max abs diff = {jnp.max(jnp.abs(out_f32 - ref))}")

    # Production path: bf16 MXU operands + bf16 slab, f32 accumulation / BN math.
    out_bf16 = jax.block_until_ready(
        conv_bn_forward(x, weight, bias, gamma, beta))
    assert out_bf16.shape == (N, Cout, H, W)
    assert jnp.allclose(out_bf16, ref, atol=5e-2, rtol=5e-2), (
        f"bf16 max abs diff = {jnp.max(jnp.abs(out_bf16 - ref))}")

    print("KERNEL_OK")
</pallas_src>

<mosaic_0001>
module attributes {stable_mosaic.version = 11 : i64} {
  func.func @_conv_stats_kernel(%arg0: i32, %arg1: i32, %arg2: memref<512x128xf32, #tpu.memory_space<vmem>>, %arg3: memref<128x128xf32, #tpu.memory_space<vmem>>, %arg4: memref<512x128xf32, #tpu.memory_space<vmem>>, %arg5: memref<1x2x128xf32, #tpu.memory_space<vmem>>) attributes {dimension_semantics = [#tpu.dimension_semantics<parallel>, #tpu.dimension_semantics<parallel>], iteration_bounds = array<i64: 1, 1>, scalar_prefetch = 0 : i64, scratch_operands = 0 : i64, tpu.core_type = #tpu.core_type<tc>, window_params = [{transform_indices = @transform_0, window_bounds = array<i64: 512, 128>}, {transform_indices = @transform_1, window_bounds = array<i64: 128, 128>}, {transform_indices = @transform_2, window_bounds = array<i64: 512, 128>}, {transform_indices = @transform_3, window_bounds = array<i64: 1, 2, 128>}]} {
    %c0 = arith.constant 0 : index
    %c0_0 = arith.constant 0 : index
    %0 = vector.load %arg2[%c0, %c0_0] : memref<512x128xf32, #tpu.memory_space<vmem>>, vector<512x128xf32>
    %c0_1 = arith.constant 0 : index
    %c0_2 = arith.constant 0 : index
    %1 = vector.load %arg3[%c0_1, %c0_2] : memref<128x128xf32, #tpu.memory_space<vmem>>, vector<128x128xf32>
    %cst = arith.constant dense<0.000000e+00> : vector<512x128xf32>
    %2 = tpu.matmul %0, %1, %cst {dimension_numbers = #tpu.dot_dimension_numbers<[1], [0], [0], [1], [0, 0, 1, 1], [], []>} : vector<512x128xf32>, vector<128x128xf32>, vector<512x128xf32> -> vector<512x128xf32>
    %c0_3 = arith.constant 0 : index
    %c0_4 = arith.constant 0 : index
    %3 = vector.load %arg4[%c0_3, %c0_4] : memref<512x128xf32, #tpu.memory_space<vmem>>, vector<512x128xf32>
    tpu.vector_store %arg4[%c0_3, %c0_4], %2 {strides = array<i32>} : memref<512x128xf32, #tpu.memory_space<vmem>>, vector<512x128xf32>,
    %cst_5 = arith.constant 1.000000e+00 : f32
    %4 = vector.broadcast %cst_5 : f32 to vector<1x512xf32>
    %cst_6 = arith.constant dense<0.000000e+00> : vector<1x128xf32>
    %5 = tpu.matmul %4, %2, %cst_6 {dimension_numbers = #tpu.dot_dimension_numbers<[1], [0], [0], [1], [0, 0, 1, 1], [], []>} : vector<1x512xf32>, vector<512x128xf32>, vector<1x128xf32> -> vector<1x128xf32>
    %6 = arith.mulf %2, %2 : vector<512x128xf32>
    %cst_7 = arith.constant dense<0.000000e+00> : vector<1x128xf32>
    %7 = tpu.matmul %4, %6, %cst_7 {dimension_numbers = #tpu.dot_dimension_numbers<[1], [0], [0], [1], [0, 0, 1, 1], [], []>} : vector<1x512xf32>, vector<512x128xf32>, vector<1x128xf32> -> vector<1x128xf32>
    %8 = tpu.concatenate %5, %7 in 0 : vector<1x128xf32>, vector<1x128xf32> -> vector<2x128xf32>
    %9 = vector.shape_cast %8 : vector<2x128xf32> to vector<1x2x128xf32>
    %c0_8 = arith.constant 0 : index
    %c0_9 = arith.constant 0 : index
    %c0_10 = arith.constant 0 : index
    %10 = vector.load %arg5[%c0_8, %c0_9, %c0_10] : memref<1x2x128xf32, #tpu.memory_space<vmem>>, vector<1x2x128xf32>
    tpu.vector_store %arg5[%c0_8, %c0_9, %c0_10], %9 {strides = array<i32>} : memref<1x2x128xf32, #tpu.memory_space<vmem>>, vector<1x2x128xf32>,
    return
  }
  func.func @transform_0(%arg0: i32, %arg1: i32) -> (i32, i32) {
    %c0_i32 = arith.constant 0 : i32
    %c0_i32_0 = arith.constant 0 : i32
    return %arg0, %c0_i32 : i32, i32
  }
  func.func @transform_1(%arg0: i32, %arg1: i32) -> (i32, i32) {
    %c0_i32 = arith.constant 0 : i32
    %c0_i32_0 = arith.constant 0 : i32
    return %c0_i32, %arg1 : i32, i32
  }
  func.func @transform_2(%arg0: i32, %arg1: i32) -> (i32, i32) {
    %c0_i32 = arith.constant 0 : i32
    return %arg0, %arg1 : i32, i32
  }
  func.func @transform_3(%arg0: i32, %arg1: i32) -> (i32, i32, i32) {
    %c0_i32 = arith.constant 0 : i32
    %c0_i32_0 = arith.constant 0 : i32
    return %arg0, %c0_i32, %arg1 : i32, i32, i32
  }
}

</mosaic_0001>

<llo_original>
// kernel: tpu_custom_call.1
$region0: #{tpu_custom_call.1}
  #allocation0 [shape = 'u32[]', space=smem, size = 0x4, offset = 0x4, fixed_abs, tag = 'smem constant byte address 0x4 - core index']
  #allocation1 [shape = 'u32[144,128]{1,0:T(1,128)}', space=vmem, size = 0x12000, scoped, tag = 'internal scratch']
  %s0 = inlined_call_operand.hbm [shape: f32[512,128], index: 0, kind: input, shape index: {}]
  %s1 = inlined_call_operand.hbm [shape: f32[128,128], index: 1, kind: input, shape index: {}]
  %s2 = inlined_call_operand.hbm [shape: f32[512,128], index: 2, kind: output, shape index: {0}]
  %s3 = inlined_call_operand.hbm [shape: f32[1,2,128], index: 3, kind: output, shape index: {1}]
  %4 = xla_tuple %s2, %s3
  %s5 = sld [smem:[#allocation0]]
  $region34: #{tpu_custom_call.1} parent=0
    _
  %s7 = ssub.s32 1, %s5
  %s8 = scalar_select 0, %s7, %s5
  $region1: #{tpu_custom_call.1} parent=0
    #allocation2 [shape = 'u8[262144]{0}', space=vmem, size = 0x40000, scoped, tag = 'input window, operand 0, single buffered']
    #allocation3 [shape = 's32[1]{0}', space=sflag, size = 0x4, scoped, tag = 'scoped memory for tpu_custom_call.1']
    #allocation4 [shape = 's32[1]{0}', space=sflag, size = 0x4, scoped, tag = 'scoped memory for tpu_custom_call.1']
    #allocation5 [shape = 'u8[65536]{0}', space=vmem, size = 0x10000, scoped, tag = 'input window, operand 1, single buffered']
    #allocation6 [shape = 's32[1]{0}', space=sflag, size = 0x4, scoped, tag = 'scoped memory for tpu_custom_call.1']
    #allocation7 [shape = 'u8[262144]{0}', space=vmem, size = 0x40000, scoped, tag = 'output window, operand 0, single buffered']
    #allocation8 [shape = 'u8[1024]{0}', space=vmem, size = 0x400, scoped, tag = 'output window, operand 1, single buffered']
    #allocation9 [shape = 's32[1]{0}', space=sflag, size = 0x4, scoped, tag = 'scoped memory for tpu_custom_call.1']
    %9 = vsyncpa [#allocation3], 0
    %10 = vsyncpa [#allocation6], 0
    %11 = vsyncpa [#allocation4], 0
    %12 = vsyncpa [#allocation9], 0
    // Predicated region
    $region2: #{tpu_custom_call.1} parent=1 // pred_check
      _
    $region3: #{tpu_custom_call.1} parent=1 // pred_check_branch
      %14 = sbr.rel (0) target = $region5
    $region4: #{tpu_custom_call.1} parent=1 // pred_region
      %s16 = ssub.s32 8192, 8192
      %17 = vsyncadd [#allocation3], %s16
      %s18 = sshll.u32 [#allocation2], 4
      %s19 = int_to_ptr.vmem [resolvable:$true] %s18
      %24 = dma.hbm_to_vmem [thread:$0]  %s0, 8192, %s19, [#allocation3], 128, 128, 8
    $region5: #{tpu_custom_call.1} parent=1 // pred_fallthru
      _
    // Predicated region
    $region6: #{tpu_custom_call.1} parent=1 // pred_check
      _
    $region7: #{tpu_custom_call.1} parent=1 // pred_check_branch
      %26 = sbr.rel (0) target = $region9
    $region8: #{tpu_custom_call.1} parent=1 // pred_region
      %s28 = ssub.s32 2048, 2048
      %29 = vsyncadd [#allocation6], %s28
      %s30 = sshll.u32 [#allocation5], 4
      %s31 = int_to_ptr.vmem [resolvable:$true] %s30
      %36 = dma.hbm_to_vmem [thread:$0]  %s1, 2048, %s31, [#allocation6], 128, 128, 8
    $region9: #{tpu_custom_call.1} parent=1 // pred_fallthru
      _
    // Predicated region
    $region10: #{tpu_custom_call.1} parent=1 // pred_check
      _
    $region11: #{tpu_custom_call.1} parent=1 // pred_check_branch
      %38 = sbr.rel (0) target = $region13
    $region12: #{tpu_custom_call.1} parent=1 // pred_region
      %39 = dma.done [#allocation3], 8192
    $region13: #{tpu_custom_call.1} parent=1 // pred_fallthru
      _
    // Predicated region
    $region14: #{tpu_custom_call.1} parent=1 // pred_check
      _
    $region15: #{tpu_custom_call.1} parent=1 // pred_check_branch
      %41 = sbr.rel (0) target = $region17
    $region16: #{tpu_custom_call.1} parent=1 // pred_region
      %42 = dma.done [#allocation6], 2048
    $region17: #{tpu_custom_call.1} parent=1 // pred_fallthru
      _
    %v43 = vld [vmem:[#allocation2] sm:$0xff]
    %v44 = vld [vmem:[#allocation2 + $0x8] sm:$0xff]
    %v45 = vld [vmem:[#allocation2 + $0x10] sm:$0xff]
    %v46 = vld [vmem:[#allocation2 + $0x18] sm:$0xff]
    %v47 = vld [vmem:[#allocation2 + $0x20] sm:$0xff]
    %v48 = vld [vmem:[#allocation2 + $0x28] sm:$0xff]
    %v49 = vld [vmem:[#allocation2 + $0x30] sm:$0xff]
    %v50 = vld [vmem:[#allocation2 + $0x38] sm:$0xff]
    %v51 = vld [vmem:[#allocation2 + $0x40] sm:$0xff]
    %v52 = vld [vmem:[#allocation2 + $0x48] sm:$0xff]
    %v53 = vld [vmem:[#allocation2 + $0x50] sm:$0xff]
    %v54 = vld [vmem:[#allocation2 + $0x58] sm:$0xff]
    %v55 = vld [vmem:[#allocation2 + $0x60] sm:$0xff]
    %v56 = vld [vmem:[#allocation2 + $0x68] sm:$0xff]
    %v57 = vld [vmem:[#allocation2 + $0x70] sm:$0xff]
    %v58 = vld [vmem:[#allocation2 + $0x78] sm:$0xff]
    %v59 = vld [vmem:[#allocation2 + $0x80] sm:$0xff]
    %v60 = vld [vmem:[#allocation2 + $0x88] sm:$0xff]
    %v61 = vld [vmem:[#allocation2 + $0x90] sm:$0xff]
    %v62 = vld [vmem:[#allocation2 + $0x98] sm:$0xff]
    %v63 = vld [vmem:[#allocation2 + $0xa0] sm:$0xff]
    %v64 = vld [vmem:[#allocation2 + $0xa8] sm:$0xff]
    %v65 = vld [vmem:[#allocation2 + $0xb0] sm:$0xff]
    %v66 = vld [vmem:[#allocation2 + $0xb8] sm:$0xff]
    %v67 = vld [vmem:[#allocation2 + $0xc0] sm:$0xff]
    %v68 = vld [vmem:[#allocation2 + $0xc8] sm:$0xff]
    %v69 = vld [vmem:[#allocation2 + $0xd0] sm:$0xff]
    %v70 = vld [vmem:[#allocation2 + $0xd8] sm:$0xff]
    %v71 = vld [vmem:[#allocation2 + $0xe0] sm:$0xff]
    %v72 = vld [vmem:[#allocation2 + $0xe8] sm:$0xff]
    %v73 = vld [vmem:[#allocation2 + $0xf0] sm:$0xff]
    %v74 = vld [vmem:[#allocation2 + $0xf8] sm:$0xff]
    %v75 = vld [vmem:[#allocation2 + $0x100] sm:$0xff]
    %v76 = vld [vmem:[#allocation2 + $0x108] sm:$0xff]
    %v77 = vld [vmem:[#allocation2 + $0x110] sm:$0xff]
    %v78 = vld [vmem:[#allocation2 + $0x118] sm:$0xff]
    %v79 = vld [vmem:[#allocation2 + $0x120] sm:$0xff]
    %v80 = vld [vmem:[#allocation2 + $0x128] sm:$0xff]
    %v81 = vld [vmem:[#allocation2 + $0x130] sm:$0xff]
    %v82 = vld [vmem:[#allocation2 + $0x138] sm:$0xff]
    %v83 = vld [vmem:[#allocation2 + $0x140] sm:$0xff]
    %v84 = vld [vmem:[#allocation2 + $0x148] sm:$0xff]
    %v85 = vld [vmem:[#allocation2 + $0x150] sm:$0xff]
    %v86 = vld [vmem:[#allocation2 + $0x158] sm:$0xff]
    %v87 = vld [vmem:[#allocation2 + $0x160] sm:$0xff]
    %v88 = vld [vmem:[#allocation2 + $0x168] sm:$0xff]
    %v89 = vld [vmem:[#allocation2 + $0x170] sm:$0xff]
    %v90 = vld [vmem:[#allocation2 + $0x178] sm:$0xff]
    %v91 = vld [vmem:[#allocation2 + $0x180] sm:$0xff]
    %v92 = vld [vmem:[#allocation2 + $0x188] sm:$0xff]
    %v93 = vld [vmem:[#allocation2 + $0x190] sm:$0xff]
    %v94 = vld [vmem:[#allocation2 + $0x198] sm:$0xff]
    %v95 = vld [vmem:[#allocation2 + $0x1a0] sm:$0xff]
    %v96 = vld [vmem:[#allocation2 + $0x1a8] sm:$0xff]
    %v97 = vld [vmem:[#allocation2 + $0x1b0] sm:$0xff]
    %v98 = vld [vmem:[#allocation2 + $0x1b8] sm:$0xff]
    %v99 = vld [vmem:[#allocation2 + $0x1c0] sm:$0xff]
    %v100 = vld [vmem:[#allocation2 + $0x1c8] sm:$0xff]
    %v101 = vld [vmem:[#allocation2 + $0x1d0] sm:$0xff]
    %v102 = vld [vmem:[#allocation2 + $0x1d8] sm:$0xff]
    %v103 = vld [vmem:[#allocation2 + $0x1e0] sm:$0xff]
    %v104 = vld [vmem:[#allocation2 + $0x1e8] sm:$0xff]
    %v105 = vld [vmem:[#allocation2 + $0x1f0] sm:$0xff]
    %v106 = vld [vmem:[#allocation2 + $0x1f8] sm:$0xff]
    %v107 = vld [vmem:[#allocation5] sm:$0xff]
    %v108 = vld [vmem:[#allocation5 + $0x8] sm:$0xff]
    %v109 = vld [vmem:[#allocation5 + $0x10] sm:$0xff]
    %v110 = vld [vmem:[#allocation5 + $0x18] sm:$0xff]
    %v111 = vld [vmem:[#allocation5 + $0x20] sm:$0xff]
    %v112 = vld [vmem:[#allocation5 + $0x28] sm:$0xff]
    %v113 = vld [vmem:[#allocation5 + $0x30] sm:$0xff]
    %v114 = vld [vmem:[#allocation5 + $0x38] sm:$0xff]
    %v115 = vld [vmem:[#allocation5 + $0x40] sm:$0xff]
    %v116 = vld [vmem:[#allocation5 + $0x48] sm:$0xff]
    %v117 = vld [vmem:[#allocation5 + $0x50] sm:$0xff]
    %v118 = vld [vmem:[#allocation5 + $0x58] sm:$0xff]
    %v119 = vld [vmem:[#allocation5 + $0x60] sm:$0xff]
    %v120 = vld [vmem:[#allocation5 + $0x68] sm:$0xff]
    %v121 = vld [vmem:[#allocation5 + $0x70] sm:$0xff]
    %v122 = vld [vmem:[#allocation5 + $0x78] sm:$0xff]
    %123 = vmatprep.subr.mxu0 0.0
    %124 = vmatpush1.msra.mxu0 %v107
    %125 = vmatprep.subr.mxu0 0.0
    %126 = vmatpush1.msra.mxu0 %v108
    %127 = vmatprep.subr.mxu0 0.0
    %128 = vmatpush1.msra.mxu0 %v109
    %129 = vmatprep.subr.mxu0 0.0
    %130 = vmatpush1.msra.mxu0 %v110
    %131 = vmatprep.subr.mxu0 0.0
    %132 = vmatpush1.msra.mxu0 %v111
    %133 = vmatprep.subr.mxu0 0.0
    %134 = vmatpush1.msra.mxu0 %v112
    %135 = vmatprep.subr.mxu0 0.0
    %136 = vmatpush1.msra.mxu0 %v113
    %137 = vmatprep.subr.mxu0 0.0
    %138 = vmatpush1.msra.mxu0 %v114
    %139 = vmatprep.subr.mxu0 0.0
    %140 = vmatpush1.msra.mxu0 %v115
    %141 = vmatprep.subr.mxu0 0.0
    %142 = vmatpush1.msra.mxu0 %v116
    %143 = vmatprep.subr.mxu0 0.0
    %144 = vmatpush1.msra.mxu0 %v117
    %145 = vmatprep.subr.mxu0 0.0
    %146 = vmatpush1.msra.mxu0 %v118
    %147 = vmatprep.subr.mxu0 0.0
    %148 = vmatpush1.msra.mxu0 %v119
    %149 = vmatprep.subr.mxu0 0.0
    %150 = vmatpush1.msra.mxu0 %v120
    %151 = vmatprep.subr.mxu0 0.0
    %152 = vmatpush1.msra.mxu0 %v121
    %153 = vmatprep.subr.mxu0 0.0
    %154 = vmatpush1.msra.mxu0 %v122
    %155 = vmatprep.subr.mxu0 0.0
    %156 = vmatpush1.msra.mxu0 0.0
    %157 = vmatprep.subr.mxu0 0.0
    %158 = vmatpush1.msra.mxu0 0.0
    %159 = vmatprep.subr.mxu0 0.0
    %160 = vmatpush1.msra.mxu0 0.0
    %161 = vmatprep.subr.mxu0 0.0
    %162 = vmatpush1.msra.mxu0 0.0
    %163 = vmatprep.subr.mxu0 0.0
    %164 = vmatpush1.msra.mxu0 0.0
    %165 = vmatprep.subr.mxu0 0.0
    %166 = vmatpush1.msra.mxu0 0.0
    %167 = vmatprep.subr.mxu0 0.0
    %168 = vmatpush1.msra.mxu0 0.0
    %169 = vmatprep.subr.mxu0 0.0
    %170 = vmatpush1.msra.mxu0 0.0
    %171 = vmatprep.subr.mxu0 0.0
    %172 = vmatpush1.msra.mxu0 0.0
    %173 = vmatprep.subr.mxu0 0.0
    %174 = vmatpush1.msra.mxu0 0.0
    %175 = vmatprep.subr.mxu0 0.0
    %176 = vmatpush1.msra.mxu0 0.0
    %177 = vmatprep.subr.mxu0 0.0
    %178 = vmatpush1.msra.mxu0 0.0
    %179 = vmatprep.subr.mxu0 0.0
    %180 = vmatpush1.msra.mxu0 0.0
    %181 = vmatprep.subr.mxu0 0.0
    %182 = vmatpush1.msra.mxu0 0.0
    %183 = vmatprep.subr.mxu0 0.0
    %184 = vmatpush1.msra.mxu0 0.0
    %185 = vmatprep.subr.mxu0 0.0
    %186 = vmatpush1.msra.mxu0 0.0
    %187 = vmatprep.mubr.f32.mxu0 0.0
    %188 = vmatmul.mubr.f32.gmra.mrb[0].mxu0 %v43
    %v189 = vpop.f32.mrb[0].mxu0
    %v190 = vadd.f32 0.0, %v189
    %v191 = vpop.f32.mrb[0].mxu0
    %192 = vmatprep.mubr.f32.mxu0 0.0
    %193 = vmatmul.mubr.f32.gmra.mrb[0].mxu0 %v44
    %v194 = vpop.f32.mrb[0].mxu0
    %v195 = vadd.f32 0.0, %v194
    %v196 = vpop.f32.mrb[0].mxu0
    %197 = vmatprep.mubr.f32.mxu0 0.0
    %198 = vmatmul.mubr.f32.gmra.mrb[0].mxu0 %v45
    %v199 = vpop.f32.mrb[0].mxu0
    %v200 = vadd.f32 0.0, %v199
    %v201 = vpop.f32.mrb[0].mxu0
    %202 = vmatprep.mubr.f32.mxu0 0.0
    %203 = vmatmul.mubr.f32.gmra.mrb[0].mxu0 %v46
    %v204 = vpop.f32.mrb[0].mxu0
    %v205 = vadd.f32 0.0, %v204
    %v206 = vpop.f32.mrb[0].mxu0
    %207 = vmatprep.mubr.f32.mxu0 0.0
    %208 = vmatmul.mubr.f32.gmra.mrb[0].mxu0 %v47
    %v209 = vpop.f32.mrb[0].mxu0
    %v210 = vadd.f32 0.0, %v209
    %v211 = vpop.f32.mrb[0].mxu0
    %212 = vmatprep.mubr.f32.mxu0 0.0
    %213 = vmatmul.mubr.f32.gmra.mrb[0].mxu0 %v48
    %v214 = vpop.f32.mrb[0].mxu0
    %v215 = vadd.f32 0.0, %v214
    %v216 = vpop.f32.mrb[0].mxu0
    %217 = vmatprep.mubr.f32.mxu0 0.0
    %218 = vmatmul.mubr.f32.gmra.mrb[0].mxu0 %v49
    %v219 = vpop.f32.mrb[0].mxu0
    %v220 = vadd.f32 0.0, %v219
    %v221 = vpop.f32.mrb[0].mxu0
    %222 = vmatprep.mubr.f32.mxu0 0.0
    %223 = vmatmul.mubr.f32.gmra.mrb[0].mxu0 %v50
    %v224 = vpop.f32.mrb[0].mxu0
    %v225 = vadd.f32 0.0, %v224
    %v226 = vpop.f32.mrb[0].mxu0
    %227 = vmatprep.mubr.f32.mxu0 0.0
    %228 = vmatmul.mubr.f32.gmra.mrb[0].mxu0 %v51
    %v229 = vpop.f32.mrb[0].mxu0
    %v230 = vadd.f32 0.0, %v229
    %v231 = vpop.f32.mrb[0].mxu0
    %232 = vmatprep.mubr.f32.mxu0 0.0
    %233 = vmatmul.mubr.f32.gmra.mrb[0].mxu0 %v52
    %v234 = vpop.f32.mrb[0].mxu0
    %v235 = vadd.f32 0.0, %v234
    %v236 = vpop.f32.mrb[0].mxu0
    %237 = vmatprep.mubr.f32.mxu0 0.0
    %238 = vmatmul.mubr.f32.gmra.mrb[0].mxu0 %v53
    %v239 = vpop.f32.mrb[0].mxu0
    %v240 = vadd.f32 0.0, %v239
    %v241 = vpop.f32.mrb[0].mxu0
    %242 = vmatprep.mubr.f32.mxu0 0.0
    %243 = vmatmul.mubr.f32.gmra.mrb[0].mxu0 %v54
    %v244 = vpop.f32.mrb[0].mxu0
    %v245 = vadd.f32 0.0, %v244
    %v246 = vpop.f32.mrb[0].mxu0
    %247 = vmatprep.mubr.f32.mxu0 0.0
    %248 = vmatmul.mubr.f32.gmra.mrb[0].mxu0 %v55
    %v249 = vpop.f32.mrb[0].mxu0
    %v250 = vadd.f32 0.0, %v249
    %v251 = vpop.f32.mrb[0].mxu0
    %252 = vmatprep.mubr.f32.mxu0 0.0
    %253 = vmatmul.mubr.f32.gmra.mrb[0].mxu0 %v56
    %v254 = vpop.f32.mrb[0].mxu0
    %v255 = vadd.f32 0.0, %v254
    %v256 = vpop.f32.mrb[0].mxu0
    %257 = vmatprep.mubr.f32.mxu0 0.0
    %258 = vmatmul.mubr.f32.gmra.mrb[0].mxu0 %v57
    %v259 = vpop.f32.mrb[0].mxu0
    %v260 = vadd.f32 0.0, %v259
    %v261 = vpop.f32.mrb[0].mxu0
    %262 = vmatprep.mubr.f32.mxu0 0.0
    %263 = vmatmul.mubr.f32.gmra.mrb[0].mxu0 %v58
    %v264 = vpop.f32.mrb[0].mxu0
    %v265 = vadd.f32 0.0, %v264
    %v266 = vpop.f32.mrb[0].mxu0
    %267 = vmatprep.mubr.f32.mxu0 0.0
    %268 = vmatmul.mubr.f32.gmra.mrb[0].mxu0 %v59
    %v269 = vpop.f32.mrb[0].mxu0
    %v270 = vadd.f32 0.0, %v269
    %v271 = vpop.f32.mrb[0].mxu0
    %272 = vmatprep.mubr.f32.mxu0 0.0
    %273 = vmatmul.mubr.f32.gmra.mrb[0].mxu0 %v60
    %v274 = vpop.f32.mrb[0].mxu0
    %v275 = vadd.f32 0.0, %v274
    %v276 = vpop.f32.mrb[0].mxu0
    %277 = vmatprep.mubr.f32.mxu0 0.0
    %278 = vmatmul.mubr.f32.gmra.mrb[0].mxu0 %v61
    %v279 = vpop.f32.mrb[0].mxu0
    %v280 = vadd.f32 0.0, %v279
    %v281 = vpop.f32.mrb[0].mxu0
    %282 = vmatprep.mubr.f32.mxu0 0.0
    %283 = vmatmul.mubr.f32.gmra.mrb[0].mxu0 %v62
    %v284 = vpop.f32.mrb[0].mxu0
    %v285 = vadd.f32 0.0, %v284
    %v286 = vpop.f32.mrb[0].mxu0
    %287 = vmatprep.mubr.f32.mxu0 0.0
    %288 = vmatmul.mubr.f32.gmra.mrb[0].mxu0 %v63
    %v289 = vpop.f32.mrb[0].mxu0
    %v290 = vadd.f32 0.0, %v289
    %v291 = vpop.f32.mrb[0].mxu0
    %292 = vmatprep.mubr.f32.mxu0 0.0
    %293 = vmatmul.mubr.f32.gmra.mrb[0].mxu0 %v64
    %v294 = vpop.f32.mrb[0].mxu0
    %v295 = vadd.f32 0.0, %v294
    %v296 = vpop.f32.mrb[0].mxu0
    %297 = vmatprep.mubr.f32.mxu0 0.0
    %298 = vmatmul.mubr.f32.gmra.mrb[0].mxu0 %v65
    %v299 = vpop.f32.mrb[0].mxu0
    %v300 = vadd.f32 0.0, %v299
    %v301 = vpop.f32.mrb[0].mxu0
    %302 = vmatprep.mubr.f32.mxu0 0.0
    %303 = vmatmul.mubr.f32.gmra.mrb[0].mxu0 %v66
    %v304 = vpop.f32.mrb[0].mxu0
    %v305 = vadd.f32 0.0, %v304
    %v306 = vpop.f32.mrb[0].mxu0
    %307 = vmatprep.mubr.f32.mxu0 0.0
    %308 = vmatmul.mubr.f32.gmra.mrb[0].mxu0 %v67
    %v309 = vpop.f32.mrb[0].mxu0
    %v310 = vadd.f32 0.0, %v309
    %v311 = vpop.f32.mrb[0].mxu0
    %312 = vmatprep.mubr.f32.mxu0 0.0
    %313 = vmatmul.mubr.f32.gmra.mrb[0].mxu0 %v68
    %v314 = vpop.f32.mrb[0].mxu0
    %v315 = vadd.f32 0.0, %v314
    %v316 = vpop.f32.mrb[0].mxu0
    %317 = vmatprep.mubr.f32.mxu0 0.0
    %318 = vmatmul.mubr.f32.gmra.mrb[0].mxu0 %v69
    %v319 = vpop.f32.mrb[0].mxu0
    %v320 = vadd.f32 0.0, %v319
    %v321 = vpop.f32.mrb[0].mxu0
    %322 = vmatprep.mubr.f32.mxu0 0.0
    %323 = vmatmul.mubr.f32.gmra.mrb[0].mxu0 %v70
    %v324 = vpop.f32.mrb[0].mxu0
    %v325 = vadd.f32 0.0, %v324
    %v326 = vpop.f32.mrb[0].mxu0
    %327 = vmatprep.mubr.f32.mxu0 0.0
    %328 = vmatmul.mubr.f32.gmra.mrb[0].mxu0 %v71
    %v329 = vpop.f32.mrb[0].mxu0
    %v330 = vadd.f32 0.0, %v329
    %v331 = vpop.f32.mrb[0].mxu0
    %332 = vmatprep.mubr.f32.mxu0 0.0
    %333 = vmatmul.mubr.f32.gmra.mrb[0].mxu0 %v72
    %v334 = vpop.f32.mrb[0].mxu0
    %v335 = vadd.f32 0.0, %v334
    %v336 = vpop.f32.mrb[0].mxu0
    %337 = vmatprep.mubr.f32.mxu0 0.0
    %338 = vmatmul.mubr.f32.gmra.mrb[0].mxu0 %v73
    %v339 = vpop.f32.mrb[0].mxu0
    %v340 = vadd.f32 0.0, %v339
    %v341 = vpop.f32.mrb[0].mxu0
    %342 = vmatprep.mubr.f32.mxu0 0.0
    %343 = vmatmul.mubr.f32.gmra.mrb[0].mxu0 %v74
    %v344 = vpop.f32.mrb[0].mxu0
    %v345 = vadd.f32 0.0, %v344
    %v346 = vpop.f32.mrb[0].mxu0
    %347 = vmatprep.mubr.f32.mxu0 0.0
    %348 = vmatmul.mubr.f32.gmra.mrb[0].mxu0 %v75
    %v349 = vpop.f32.mrb[0].mxu0
    %v350 = vadd.f32 0.0, %v349
    %v351 = vpop.f32.mrb[0].mxu0
    %352 = vmatprep.mubr.f32.mxu0 0.0
    %353 = vmatmul.mubr.f32.gmra.mrb[0].mxu0 %v76
    %v354 = vpop.f32.mrb[0].mxu0
    %v355 = vadd.f32 0.0, %v354
    %v356 = vpop.f32.mrb[0].mxu0
    %357 = vmatprep.mubr.f32.mxu0 0.0
    %358 = vmatmul.mubr.f32.gmra.mrb[0].mxu0 %v77
    %v359 = vpop.f32.mrb[0].mxu0
    %v360 = vadd.f32 0.0, %v359
    %v361 = vpop.f32.mrb[0].mxu0
    %362 = vmatprep.mubr.f32.mxu0 0.0
    %363 = vmatmul.mubr.f32.gmra.mrb[0].mxu0 %v78
    %v364 = vpop.f32.mrb[0].mxu0
    %v365 = vadd.f32 0.0, %v364
    %v366 = vpop.f32.mrb[0].mxu0
    %367 = vmatprep.mubr.f32.mxu0 0.0
    %368 = vmatmul.mubr.f32.gmra.mrb[0].mxu0 %v79
    %v369 = vpop.f32.mrb[0].mxu0
    %v370 = vadd.f32 0.0, %v369
    %v371 = vpop.f32.mrb[0].mxu0
    %372 = vmatprep.mubr.f32.mxu0 0.0
    %373 = vmatmul.mubr.f32.gmra.mrb[0].mxu0 %v80
    %v374 = vpop.f32.mrb[0].mxu0
    %v375 = vadd.f32 0.0, %v374
    %v376 = vpop.f32.mrb[0].mxu0
    %377 = vmatprep.mubr.f32.mxu0 0.0
    %378 = vmatmul.mubr.f32.gmra.mrb[0].mxu0 %v81
    %v379 = vpop.f32.mrb[0].mxu0
    %v380 = vadd.f32 0.0, %v379
    %v381 = vpop.f32.mrb[0].mxu0
    %382 = vmatprep.mubr.f32.mxu0 0.0
    %383 = vmatmul.mubr.f32.gmra.mrb[0].mxu0 %v82
    %v384 = vpop.f32.mrb[0].mxu0
    %v385 = vadd.f32 0.0, %v384
    %v386 = vpop.f32.mrb[0].mxu0
    %387 = vmatprep.mubr.f32.mxu0 0.0
    %388 = vmatmul.mubr.f32.gmra.mrb[0].mxu0 %v83
    %v389 = vpop.f32.mrb[0].mxu0
    %v390 = vadd.f32 0.0, %v389
    %v391 = vpop.f32.mrb[0].mxu0
    %392 = vmatprep.mubr.f32.mxu0 0.0
    %393 = vmatmul.mubr.f32.gmra.mrb[0].mxu0 %v84
    %v394 = vpop.f32.mrb[0].mxu0
    %v395 = vadd.f32 0.0, %v394
    %v396 = vpop.f32.mrb[0].mxu0
    %397 = vmatprep.mubr.f32.mxu0 0.0
    %398 = vmatmul.mubr.f32.gmra.mrb[0].mxu0 %v85
    %v399 = vpop.f32.mrb[0].mxu0
    %v400 = vadd.f32 0.0, %v399
    %v401 = vpop.f32.mrb[0].mxu0
    %402 = vmatprep.mubr.f32.mxu0 0.0
    %403 = vmatmul.mubr.f32.gmra.mrb[0].mxu0 %v86
    %v404 = vpop.f32.mrb[0].mxu0
    %v405 = vadd.f32 0.0, %v404
    %v406 = vpop.f32.mrb[0].mxu0
    %407 = vmatprep.mubr.f32.mxu0 0.0
    %408 = vmatmul.mubr.f32.gmra.mrb[0].mxu0 %v87
    %v409 = vpop.f32.mrb[0].mxu0
    %v410 = vadd.f32 0.0, %v409
    %v411 = vpop.f32.mrb[0].mxu0
    %412 = vmatprep.mubr.f32.mxu0 0.0
    %413 = vmatmul.mubr.f32.gmra.mrb[0].mxu0 %v88
    %v414 = vpop.f32.mrb[0].mxu0
    %v415 = vadd.f32 0.0, %v414
    %v416 = vpop.f32.mrb[0].mxu0
    %417 = vmatprep.mubr.f32.mxu0 0.0
    %418 = vmatmul.mubr.f32.gmra.mrb[0].mxu0 %v89
    %v419 = vpop.f32.mrb[0].mxu0
    %v420 = vadd.f32 0.0, %v419
    %v421 = vpop.f32.mrb[0].mxu0
    %422 = vmatprep.mubr.f32.mxu0 0.0
    %423 = vmatmul.mubr.f32.gmra.mrb[0].mxu0 %v90
    %v424 = vpop.f32.mrb[0].mxu0
    %v425 = vadd.f32 0.0, %v424
    %v426 = vpop.f32.mrb[0].mxu0
    %427 = vmatprep.mubr.f32.mxu0 0.0
    %428 = vmatmul.mubr.f32.gmra.mrb[0].mxu0 %v91
    %v429 = vpop.f32.mrb[0].mxu0
    %v430 = vadd.f32 0.0, %v429
    %v431 = vpop.f32.mrb[0].mxu0
    %432 = vmatprep.mubr.f32.mxu0 0.0
    %433 = vmatmul.mubr.f32.gmra.mrb[0].mxu0 %v92
    %v434 = vpop.f32.mrb[0].mxu0
    %v435 = vadd.f32 0.0, %v434
    %v436 = vpop.f32.mrb[0].mxu0
    %437 = vmatprep.mubr.f32.mxu0 0.0
    %438 = vmatmul.mubr.f32.gmra.mrb[0].mxu0 %v93
    %v439 = vpop.f32.mrb[0].mxu0
    %v440 = vadd.f32 0.0, %v439
    %v441 = vpop.f32.mrb[0].mxu0
    %442 = vmatprep.mubr.f32.mxu0 0.0
    %443 = vmatmul.mubr.f32.gmra.mrb[0].mxu0 %v94
    %v444 = vpop.f32.mrb[0].mxu0
    %v445 = vadd.f32 0.0, %v444
    %v446 = vpop.f32.mrb[0].mxu0
    %447 = vmatprep.mubr.f32.mxu0 0.0
    %448 = vmatmul.mubr.f32.gmra.mrb[0].mxu0 %v95
    %v449 = vpop.f32.mrb[0].mxu0
    %v450 = vadd.f32 0.0, %v449
    %v451 = vpop.f32.mrb[0].mxu0
    %452 = vmatprep.mubr.f32.mxu0 0.0
    %453 = vmatmul.mubr.f32.gmra.mrb[0].mxu0 %v96
    %v454 = vpop.f32.mrb[0].mxu0
    %v455 = vadd.f32 0.0, %v454
    %v456 = vpop.f32.mrb[0].mxu0
    %457 = vmatprep.mubr.f32.mxu0 0.0
    %458 = vmatmul.mubr.f32.gmra.mrb[0].mxu0 %v97
    %v459 = vpop.f32.mrb[0].mxu0
    %v460 = vadd.f32 0.0, %v459
    %v461 = vpop.f32.mrb[0].mxu0
    %462 = vmatprep.mubr.f32.mxu0 0.0
    %463 = vmatmul.mubr.f32.gmra.mrb[0].mxu0 %v98
    %v464 = vpop.f32.mrb[0].mxu0
    %v465 = vadd.f32 0.0, %v464
    %v466 = vpop.f32.mrb[0].mxu0
    %467 = vmatprep.mubr.f32.mxu0 0.0
    %468 = vmatmul.mubr.f32.gmra.mrb[0].mxu0 %v99
    %v469 = vpop.f32.mrb[0].mxu0
    %v470 = vadd.f32 0.0, %v469
    %v471 = vpop.f32.mrb[0].mxu0
    %472 = vmatprep.mubr.f32.mxu0 0.0
    %473 = vmatmul.mubr.f32.gmra.mrb[0].mxu0 %v100
    %v474 = vpop.f32.mrb[0].mxu0
    %v475 = vadd.f32 0.0, %v474
    %v476 = vpop.f32.mrb[0].mxu0
    %477 = vmatprep.mubr.f32.mxu0 0.0
    %478 = vmatmul.mubr.f32.gmra.mrb[0].mxu0 %v101
    %v479 = vpop.f32.mrb[0].mxu0
    %v480 = vadd.f32 0.0, %v479
    %v481 = vpop.f32.mrb[0].mxu0
    %482 = vmatprep.mubr.f32.mxu0 0.0
    %483 = vmatmul.mubr.f32.gmra.mrb[0].mxu0 %v102
    %v484 = vpop.f32.mrb[0].mxu0
    %v485 = vadd.f32 0.0, %v484
    %v486 = vpop.f32.mrb[0].mxu0
    %487 = vmatprep.mubr.f32.mxu0 0.0
    %488 = vmatmul.mubr.f32.gmra.mrb[0].mxu0 %v103
    %v489 = vpop.f32.mrb[0].mxu0
    %v490 = vadd.f32 0.0, %v489
    %v491 = vpop.f32.mrb[0].mxu0
    %492 = vmatprep.mubr.f32.mxu0 0.0
    %493 = vmatmul.mubr.f32.gmra.mrb[0].mxu0 %v104
    %v494 = vpop.f32.mrb[0].mxu0
    %v495 = vadd.f32 0.0, %v494
    %v496 = vpop.f32.mrb[0].mxu0
    %497 = vmatprep.mubr.f32.mxu0 0.0
    %498 = vmatmul.mubr.f32.gmra.mrb[0].mxu0 %v105
    %v499 = vpop.f32.mrb[0].mxu0
    %v500 = vadd.f32 0.0, %v499
    %v501 = vpop.f32.mrb[0].mxu0
    %502 = vmatprep.mubr.f32.mxu0 0.0
    %503 = vmatmul.mubr.f32.gmra.mrb[0].mxu0 %v106
    %v504 = vpop.f32.mrb[0].mxu0
    %v505 = vadd.f32 0.0, %v504
    %v506 = vpop.f32.mrb[0].mxu0
    %507 = vdwg.mxu0
    %508 = vst [vmem:[#allocation7] sm:$0xff] %v190
    %509 = vst [vmem:[#allocation7 + $0x8] sm:$0xff] %v195
    %510 = vst [vmem:[#allocation7 + $0x10] sm:$0xff] %v200
    %511 = vst [vmem:[#allocation7 + $0x18] sm:$0xff] %v205
    %512 = vst [vmem:[#allocation7 + $0x20] sm:$0xff] %v210
    %513 = vst [vmem:[#allocation7 + $0x28] sm:$0xff] %v215
    %514 = vst [vmem:[#allocation7 + $0x30] sm:$0xff] %v220
    %515 = vst [vmem:[#allocation7 + $0x38] sm:$0xff] %v225
    %516 = vst [vmem:[#allocation7 + $0x40] sm:$0xff] %v230
    %517 = vst [vmem:[#allocation7 + $0x48] sm:$0xff] %v235
    %518 = vst [vmem:[#allocation7 + $0x50] sm:$0xff] %v240
    %519 = vst [vmem:[#allocation7 + $0x58] sm:$0xff] %v245
    %520 = vst [vmem:[#allocation7 + $0x60] sm:$0xff] %v250
    %521 = vst [vmem:[#allocation7 + $0x68] sm:$0xff] %v255
    %522 = vst [vmem:[#allocation7 + $0x70] sm:$0xff] %v260
    %523 = vst [vmem:[#allocation7 + $0x78] sm:$0xff] %v265
    %524 = vst [vmem:[#allocation7 + $0x80] sm:$0xff] %v270
    %525 = vst [vmem:[#allocation7 + $0x88] sm:$0xff] %v275
    %526 = vst [vmem:[#allocation7 + $0x90] sm:$0xff] %v280
    %527 = vst [vmem:[#allocation7 + $0x98] sm:$0xff] %v285
    %528 = vst [vmem:[#allocation7 + $0xa0] sm:$0xff] %v290
    %529 = vst [vmem:[#allocation7 + $0xa8] sm:$0xff] %v295
    %530 = vst [vmem:[#allocation7 + $0xb0] sm:$0xff] %v300
    %531 = vst [vmem:[#allocation7 + $0xb8] sm:$0xff] %v305
    %532 = vst [vmem:[#allocation7 + $0xc0] sm:$0xff] %v310
    %533 = vst [vmem:[#allocation7 + $0xc8] sm:$0xff] %v315
    %534 = vst [vmem:[#allocation7 + $0xd0] sm:$0xff] %v320
    %535 = vst [vmem:[#allocation7 + $0xd8] sm:$0xff] %v325
    %536 = vst [vmem:[#allocation7 + $0xe0] sm:$0xff] %v330
    %537 = vst [vmem:[#allocation7 + $0xe8] sm:$0xff] %v335
    %538 = vst [vmem:[#allocation7 + $0xf0] sm:$0xff] %v340
    %539 = vst [vmem:[#allocation7 + $0xf8] sm:$0xff] %v345
    %540 = vst [vmem:[#allocation7 + $0x100] sm:$0xff] %v350
    %541 = vst [vmem:[#allocation7 + $0x108] sm:$0xff] %v355
    %542 = vst [vmem:[#allocation7 + $0x110] sm:$0xff] %v360
    %543 = vst [vmem:[#allocation7 + $0x118] sm:$0xff] %v365
    %544 = vst [vmem:[#allocation7 + $0x120] sm:$0xff] %v370
    %545 = vst [vmem:[#allocation7 + $0x128] sm:$0xff] %v375
    %546 = vst [vmem:[#allocation7 + $0x130] sm:$0xff] %v380
    %547 = vst [vmem:[#allocation7 + $0x138] sm:$0xff] %v385
    %548 = vst [vmem:[#allocation7 + $0x140] sm:$0xff] %v390
    %549 = vst [vmem:[#allocation7 + $0x148] sm:$0xff] %v395
    %550 = vst [vmem:[#allocation7 + $0x150] sm:$0xff] %v400
    %551 = vst [vmem:[#allocation7 + $0x158] sm:$0xff] %v405
    %552 = vst [vmem:[#allocation7 + $0x160] sm:$0xff] %v410
    %553 = vst [vmem:[#allocation7 + $0x168] sm:$0xff] %v415
    %554 = vst [vmem:[#allocation7 + $0x170] sm:$0xff] %v420
    %555 = vst [vmem:[#allocation7 + $0x178] sm:$0xff] %v425
    %556 = vst [vmem:[#allocation7 + $0x180] sm:$0xff] %v430
    %557 = vst [vmem:[#allocation7 + $0x188] sm:$0xff] %v435
    %558 = vst [vmem:[#allocation7 + $0x190] sm:$0xff] %v440
    %559 = vst [vmem:[#allocation7 + $0x198] sm:$0xff] %v445
    %560 = vst [vmem:[#allocation7 + $0x1a0] sm:$0xff] %v450
    %561 = vst [vmem:[#allocation7 + $0x1a8] sm:$0xff] %v455
    %562 = vst [vmem:[#allocation7 + $0x1b0] sm:$0xff] %v460
    %563 = vst [vmem:[#allocation7 + $0x1b8] sm:$0xff] %v465
    %564 = vst [vmem:[#allocation7 + $0x1c0] sm:$0xff] %v470
    %565 = vst [vmem:[#allocation7 + $0x1c8] sm:$0xff] %v475
    %566 = vst [vmem:[#allocation7 + $0x1d0] sm:$0xff] %v480
    %567 = vst [vmem:[#allocation7 + $0x1d8] sm:$0xff] %v485
    %568 = vst [vmem:[#allocation7 + $0x1e0] sm:$0xff] %v490
    %569 = vst [vmem:[#allocation7 + $0x1e8] sm:$0xff] %v495
    %570 = vst [vmem:[#allocation7 + $0x1f0] sm:$0xff] %v500
    %571 = vst [vmem:[#allocation7 + $0x1f8] sm:$0xff] %v505
    %572 = vmatprep.subr.mxu0 0.0
    %573 = vmatpush1.msra.mxu0 %v190
    %574 = vmatprep.subr.mxu0 0.0
    %575 = vmatpush1.msra.mxu0 %v195
    %576 = vmatprep.subr.mxu0 0.0
    %577 = vmatpush1.msra.mxu0 %v200
    %578 = vmatprep.subr.mxu0 0.0
    %579 = vmatpush1.msra.mxu0 %v205
    %580 = vmatprep.subr.mxu0 0.0
    %581 = vmatpush1.msra.mxu0 %v210
    %582 = vmatprep.subr.mxu0 0.0
    %583 = vmatpush1.msra.mxu0 %v215
    %584 = vmatprep.subr.mxu0 0.0
    %585 = vmatpush1.msra.mxu0 %v220
    %586 = vmatprep.subr.mxu0 0.0
    %587 = vmatpush1.msra.mxu0 %v225
    %588 = vmatprep.subr.mxu0 0.0
    %589 = vmatpush1.msra.mxu0 %v230
    %590 = vmatprep.subr.mxu0 0.0
    %591 = vmatpush1.msra.mxu0 %v235
    %592 = vmatprep.subr.mxu0 0.0
    %593 = vmatpush1.msra.mxu0 %v240
    %594 = vmatprep.subr.mxu0 0.0
    %595 = vmatpush1.msra.mxu0 %v245
    %596 = vmatprep.subr.mxu0 0.0
    %597 = vmatpush1.msra.mxu0 %v250
    %598 = vmatprep.subr.mxu0 0.0
    %599 = vmatpush1.msra.mxu0 %v255
    %600 = vmatprep.subr.mxu0 0.0
    %601 = vmatpush1.msra.mxu0 %v260
    %602 = vmatprep.subr.mxu0 0.0
    %603 = vmatpush1.msra.mxu0 %v265
    %604 = vmatprep.subr.mxu0 0.0
    %605 = vmatpush1.msra.mxu0 %v270
    %606 = vmatprep.subr.mxu0 0.0
    %607 = vmatpush1.msra.mxu0 %v275
    %608 = vmatprep.subr.mxu0 0.0
    %609 = vmatpush1.msra.mxu0 %v280
    %610 = vmatprep.subr.mxu0 0.0
    %611 = vmatpush1.msra.mxu0 %v285
    %612 = vmatprep.subr.mxu0 0.0
    %613 = vmatpush1.msra.mxu0 %v290
    %614 = vmatprep.subr.mxu0 0.0
    %615 = vmatpush1.msra.mxu0 %v295
    %616 = vmatprep.subr.mxu0 0.0
    %617 = vmatpush1.msra.mxu0 %v300
    %618 = vmatprep.subr.mxu0 0.0
    %619 = vmatpush1.msra.mxu0 %v305
    %620 = vmatprep.subr.mxu0 0.0
    %621 = vmatpush1.msra.mxu0 %v310
    %622 = vmatprep.subr.mxu0 0.0
    %623 = vmatpush1.msra.mxu0 %v315
    %624 = vmatprep.subr.mxu0 0.0
    %625 = vmatpush1.msra.mxu0 %v320
    %626 = vmatprep.subr.mxu0 0.0
    %627 = vmatpush1.msra.mxu0 %v325
    %628 = vmatprep.subr.mxu0 0.0
    %629 = vmatpush1.msra.mxu0 %v330
    %630 = vmatprep.subr.mxu0 0.0
    %631 = vmatpush1.msra.mxu0 %v335
    %632 = vmatprep.subr.mxu0 0.0
    %633 = vmatpush1.msra.mxu0 %v340
    %634 = vmatprep.subr.mxu0 0.0
    %635 = vmatpush1.msra.mxu0 %v345
    %636 = vmatprep.mubr.f32.mxu0 1.0
    %637 = vmatmul.mubr.f32.gmra.mrb[0].mxu0 1.0
    %v638 = vpop.f32.mrb[0].mxu0
    %v639 = vadd.f32 0.0, %v638
    %v640 = vpop.f32.mrb[0].mxu0
    %641 = vdwg.mxu0
    %642 = vmatprep.subr.mxu0 0.0
    %643 = vmatpush1.msra.mxu0 %v350
    %644 = vmatprep.subr.mxu0 0.0
    %645 = vmatpush1.msra.mxu0 %v355
    %646 = vmatprep.subr.mxu0 0.0
    %647 = vmatpush1.msra.mxu0 %v360
    %648 = vmatprep.subr.mxu0 0.0
    %649 = vmatpush1.msra.mxu0 %v365
    %650 = vmatprep.subr.mxu0 0.0
    %651 = vmatpush1.msra.mxu0 %v370
    %652 = vmatprep.subr.mxu0 0.0
    %653 = vmatpush1.msra.mxu0 %v375
    %654 = vmatprep.subr.mxu0 0.0
    %655 = vmatpush1.msra.mxu0 %v380
    %656 = vmatprep.subr.mxu0 0.0
    %657 = vmatpush1.msra.mxu0 %v385
    %658 = vmatprep.subr.mxu0 0.0
    %659 = vmatpush1.msra.mxu0 %v390
    %660 = vmatprep.subr.mxu0 0.0
    %661 = vmatpush1.msra.mxu0 %v395
    %662 = vmatprep.subr.mxu0 0.0
    %663 = vmatpush1.msra.mxu0 %v400
    %664 = vmatprep.subr.mxu0 0.0
    %665 = vmatpush1.msra.mxu0 %v405
    %666 = vmatprep.subr.mxu0 0.0
    %667 = vmatpush1.msra.mxu0 %v410
    %668 = vmatprep.subr.mxu0 0.0
    %669 = vmatpush1.msra.mxu0 %v415
    %670 = vmatprep.subr.mxu0 0.0
    %671 = vmatpush1.msra.mxu0 %v420
    %672 = vmatprep.subr.mxu0 0.0
    %673 = vmatpush1.msra.mxu0 %v425
    %674 = vmatprep.subr.mxu0 0.0
    %675 = vmatpush1.msra.mxu0 %v430
    %676 = vmatprep.subr.mxu0 0.0
    %677 = vmatpush1.msra.mxu0 %v435
    %678 = vmatprep.subr.mxu0 0.0
    %679 = vmatpush1.msra.mxu0 %v440
    %680 = vmatprep.subr.mxu0 0.0
    %681 = vmatpush1.msra.mxu0 %v445
    %682 = vmatprep.subr.mxu0 0.0
    %683 = vmatpush1.msra.mxu0 %v450
    %684 = vmatprep.subr.mxu0 0.0
    %685 = vmatpush1.msra.mxu0 %v455
    %686 = vmatprep.subr.mxu0 0.0
    %687 = vmatpush1.msra.mxu0 %v460
    %688 = vmatprep.subr.mxu0 0.0
    %689 = vmatpush1.msra.mxu0 %v465
    %690 = vmatprep.subr.mxu0 0.0
    %691 = vmatpush1.msra.mxu0 %v470
    %692 = vmatprep.subr.mxu0 0.0
    %693 = vmatpush1.msra.mxu0 %v475
    %694 = vmatprep.subr.mxu0 0.0
    %695 = vmatpush1.msra.mxu0 %v480
    %696 = vmatprep.subr.mxu0 0.0
    %697 = vmatpush1.msra.mxu0 %v485
    %698 = vmatprep.subr.mxu0 0.0
    %699 = vmatpush1.msra.mxu0 %v490
    %700 = vmatprep.subr.mxu0 0.0
    %701 = vmatpush1.msra.mxu0 %v495
    %702 = vmatprep.subr.mxu0 0.0
    %703 = vmatpush1.msra.mxu0 %v500
    %704 = vmatprep.subr.mxu0 0.0
    %705 = vmatpush1.msra.mxu0 %v505
    %706 = vmatprep.mubr.f32.mxu0 1.0
    %707 = vmatmul.mubr.f32.gmra.mrb[0].mxu0 1.0
    %v708 = vpop.f32.mrb[0].mxu0
    %v709 = vadd.f32 %v639, %v708
    %v710 = vpop.f32.mrb[0].mxu0
    %711 = vdwg.mxu0
    %v712 = vmul.f32 %v190, %v190
    %v713 = vmul.f32 %v195, %v195
    %v714 = vmul.f32 %v200, %v200
    %v715 = vmul.f32 %v205, %v205
    %v716 = vmul.f32 %v210, %v210
    %v717 = vmul.f32 %v215, %v215
    %v718 = vmul.f32 %v220, %v220
    %v719 = vmul.f32 %v225, %v225
    %v720 = vmul.f32 %v230, %v230
    %v721 = vmul.f32 %v235, %v235
    %v722 = vmul.f32 %v240, %v240
    %v723 = vmul.f32 %v245, %v245
    %v724 = vmul.f32 %v250, %v250
    %v725 = vmul.f32 %v255, %v255
    %v726 = vmul.f32 %v260, %v260
    %v727 = vmul.f32 %v265, %v265
    %v728 = vmul.f32 %v270, %v270
    %v729 = vmul.f32 %v275, %v275
    %v730 = vmul.f32 %v280, %v280
    %v731 = vmul.f32 %v285, %v285
    %v732 = vmul.f32 %v290, %v290
    %v733 = vmul.f32 %v295, %v295
    %v734 = vmul.f32 %v300, %v300
    %v735 = vmul.f32 %v305, %v305
    %v736 = vmul.f32 %v310, %v310
    %v737 = vmul.f32 %v315, %v315
    %v738 = vmul.f32 %v320, %v320
    %v739 = vmul.f32 %v325, %v325
    %v740 = vmul.f32 %v330, %v330
    %v741 = vmul.f32 %v335, %v335
    %v742 = vmul.f32 %v340, %v340
    %v743 = vmul.f32 %v345, %v345
    %v744 = vmul.f32 %v350, %v350
    %v745 = vmul.f32 %v355, %v355
    %v746 = vmul.f32 %v360, %v360
    %v747 = vmul.f32 %v365, %v365
    %v748 = vmul.f32 %v370, %v370
    %v749 = vmul.f32 %v375, %v375
    %v750 = vmul.f32 %v380, %v380
    %v751 = vmul.f32 %v385, %v385
    %v752 = vmul.f32 %v390, %v390
    %v753 = vmul.f32 %v395, %v395
    %v754 = vmul.f32 %v400, %v400
    %v755 = vmul.f32 %v405, %v405
    %v756 = vmul.f32 %v410, %v410
    %v757 = vmul.f32 %v415, %v415
    %v758 = vmul.f32 %v420, %v420
    %v759 = vmul.f32 %v425, %v425
    %v760 = vmul.f32 %v430, %v430
    %v761 = vmul.f32 %v435, %v435
    %v762 = vmul.f32 %v440, %v440
    %v763 = vmul.f32 %v445, %v445
    %v764 = vmul.f32 %v450, %v450
    %v765 = vmul.f32 %v455, %v455
    %v766 = vmul.f32 %v460, %v460
    %v767 = vmul.f32 %v465, %v465
    %v768 = vmul.f32 %v470, %v470
    %v769 = vmul.f32 %v475, %v475
    %v770 = vmul.f32 %v480, %v480
    %v771 = vmul.f32 %v485, %v485
    %v772 = vmul.f32 %v490, %v490
    %v773 = vmul.f32 %v495, %v495
    %v774 = vmul.f32 %v500, %v500
    %v775 = vmul.f32 %v505, %v505
    %776 = vmatprep.subr.mxu0 0.0
    %777 = vmatpush1.msra.mxu0 %v712
    %778 = vmatprep.subr.mxu0 0.0
    %779 = vmatpush1.msra.mxu0 %v713
    %780 = vmatprep.subr.mxu0 0.0
    %781 = vmatpush1.msra.mxu0 %v714
    %782 = vmatprep.subr.mxu0 0.0
    %783 = vmatpush1.msra.mxu0 %v715
    %784 = vmatprep.subr.mxu0 0.0
    %785 = vmatpush1.msra.mxu0 %v716
    %786 = vmatprep.subr.mxu0 0.0
    %787 = vmatpush1.msra.mxu0 %v717
    %788 = vmatprep.subr.mxu0 0.0
    %789 = vmatpush1.msra.mxu0 %v718
    %790 = vmatprep.subr.mxu0 0.0
    %791 = vmatpush1.msra.mxu0 %v719
    %792 = vmatprep.subr.mxu0 0.0
    %793 = vmatpush1.msra.mxu0 %v720
    %794 = vmatprep.subr.mxu0 0.0
    %795 = vmatpush1.msra.mxu0 %v721
    %796 = vmatprep.subr.mxu0 0.0
    %797 = vmatpush1.msra.mxu0 %v722
    %798 = vmatprep.subr.mxu0 0.0
    %799 = vmatpush1.msra.mxu0 %v723
    %800 = vmatprep.subr.mxu0 0.0
    %801 = vmatpush1.msra.mxu0 %v724
    %802 = vmatprep.subr.mxu0 0.0
    %803 = vmatpush1.msra.mxu0 %v725
    %804 = vmatprep.subr.mxu0 0.0
    %805 = vmatpush1.msra.mxu0 %v726
    %806 = vmatprep.subr.mxu0 0.0
    %807 = vmatpush1.msra.mxu0 %v727
    %808 = vmatprep.subr.mxu0 0.0
    %809 = vmatpush1.msra.mxu0 %v728
    %810 = vmatprep.subr.mxu0 0.0
    %811 = vmatpush1.msra.mxu0 %v729
    %812 = vmatprep.subr.mxu0 0.0
    %813 = vmatpush1.msra.mxu0 %v730
    %814 = vmatprep.subr.mxu0 0.0
    %815 = vmatpush1.msra.mxu0 %v731
    %816 = vmatprep.subr.mxu0 0.0
    %817 = vmatpush1.msra.mxu0 %v732
    %818 = vmatprep.subr.mxu0 0.0
    %819 = vmatpush1.msra.mxu0 %v733
    %820 = vmatprep.subr.mxu0 0.0
    %821 = vmatpush1.msra.mxu0 %v734
    %822 = vmatprep.subr.mxu0 0.0
    %823 = vmatpush1.msra.mxu0 %v735
    %824 = vmatprep.subr.mxu0 0.0
    %825 = vmatpush1.msra.mxu0 %v736
    %826 = vmatprep.subr.mxu0 0.0
    %827 = vmatpush1.msra.mxu0 %v737
    %828 = vmatprep.subr.mxu0 0.0
    %829 = vmatpush1.msra.mxu0 %v738
    %830 = vmatprep.subr.mxu0 0.0
    %831 = vmatpush1.msra.mxu0 %v739
    %832 = vmatprep.subr.mxu0 0.0
    %833 = vmatpush1.msra.mxu0 %v740
    %834 = vmatprep.subr.mxu0 0.0
    %835 = vmatpush1.msra.mxu0 %v741
    %836 = vmatprep.subr.mxu0 0.0
    %837 = vmatpush1.msra.mxu0 %v742
    %838 = vmatprep.subr.mxu0 0.0
    %839 = vmatpush1.msra.mxu0 %v743
    %840 = vmatprep.mubr.f32.mxu0 1.0
    %841 = vmatmul.mubr.f32.gmra.mrb[0].mxu0 1.0
    %v842 = vpop.f32.mrb[0].mxu0
    %v843 = vadd.f32 0.0, %v842
    %v844 = vpop.f32.mrb[0].mxu0
    %845 = vdwg.mxu0
    %846 = vmatprep.subr.mxu0 0.0
    %847 = vmatpush1.msra.mxu0 %v744
    %848 = vmatprep.subr.mxu0 0.0
    %849 = vmatpush1.msra.mxu0 %v745
    %850 = vmatprep.subr.mxu0 0.0
    %851 = vmatpush1.msra.mxu0 %v746
    %852 = vmatprep.subr.mxu0 0.0
    %853 = vmatpush1.msra.mxu0 %v747
    %854 = vmatprep.subr.mxu0 0.0
    %855 = vmatpush1.msra.mxu0 %v748
    %856 = vmatprep.subr.mxu0 0.0
    %857 = vmatpush1.msra.mxu0 %v749
    %858 = vmatprep.subr.mxu0 0.0
    %859 = vmatpush1.msra.mxu0 %v750
    %860 = vmatprep.subr.mxu0 0.0
    %861 = vmatpush1.msra.mxu0 %v751
    %862 = vmatprep.subr.mxu0 0.0
    %863 = vmatpush1.msra.mxu0 %v752
    %864 = vmatprep.subr.mxu0 0.0
    %865 = vmatpush1.msra.mxu0 %v753
    %866 = vmatprep.subr.mxu0 0.0
    %867 = vmatpush1.msra.mxu0 %v754
    %868 = vmatprep.subr.mxu0 0.0
    %869 = vmatpush1.msra.mxu0 %v755
    %870 = vmatprep.subr.mxu0 0.0
    %871 = vmatpush1.msra.mxu0 %v756
    %872 = vmatprep.subr.mxu0 0.0
    %873 = vmatpush1.msra.mxu0 %v757
    %874 = vmatprep.subr.mxu0 0.0
    %875 = vmatpush1.msra.mxu0 %v758
    %876 = vmatprep.subr.mxu0 0.0
    %877 = vmatpush1.msra.mxu0 %v759
    %878 = vmatprep.subr.mxu0 0.0
    %879 = vmatpush1.msra.mxu0 %v760
    %880 = vmatprep.subr.mxu0 0.0
    %881 = vmatpush1.msra.mxu0 %v761
    %882 = vmatprep.subr.mxu0 0.0
    %883 = vmatpush1.msra.mxu0 %v762
    %884 = vmatprep.subr.mxu0 0.0
    %885 = vmatpush1.msra.mxu0 %v763
    %886 = vmatprep.subr.mxu0 0.0
    %887 = vmatpush1.msra.mxu0 %v764
    %888 = vmatprep.subr.mxu0 0.0
    %889 = vmatpush1.msra.mxu0 %v765
    %890 = vmatprep.subr.mxu0 0.0
    %891 = vmatpush1.msra.mxu0 %v766
    %892 = vmatprep.subr.mxu0 0.0
    %893 = vmatpush1.msra.mxu0 %v767
    %894 = vmatprep.subr.mxu0 0.0
    %895 = vmatpush1.msra.mxu0 %v768
    %896 = vmatprep.subr.mxu0 0.0
    %897 = vmatpush1.msra.mxu0 %v769
    %898 = vmatprep.subr.mxu0 0.0
    %899 = vmatpush1.msra.mxu0 %v770
    %900 = vmatprep.subr.mxu0 0.0
    %901 = vmatpush1.msra.mxu0 %v771
    %902 = vmatprep.subr.mxu0 0.0
    %903 = vmatpush1.msra.mxu0 %v772
    %904 = vmatprep.subr.mxu0 0.0
    %905 = vmatpush1.msra.mxu0 %v773
    %906 = vmatprep.subr.mxu0 0.0
    %907 = vmatpush1.msra.mxu0 %v774
    %908 = vmatprep.subr.mxu0 0.0
    %909 = vmatpush1.msra.mxu0 %v775
    %910 = vmatprep.mubr.f32.mxu0 1.0
    %911 = vmatmul.mubr.f32.gmra.mrb[0].mxu0 1.0
    %v912 = vpop.f32.mrb[0].mxu0
    %v913 = vadd.f32 %v843, %v912
    %v914 = vpop.f32.mrb[0].mxu0
    %915 = vdwg.mxu0
    %v917 = vrot.slane %v913, 7
    %vm919 = vcmask 1040384
    %v920 = vsel %vm919, %v709, %v917
    %921 = vst [vmem:[#allocation8] sm:$0x3] %v920
    // Predicated region
    $region18: #{tpu_custom_call.1} parent=1 // pred_check
      _
    $region19: #{tpu_custom_call.1} parent=1 // pred_check_branch
      %923 = sbr.rel (0) target = $region21
    $region20: #{tpu_custom_call.1} parent=1 // pred_region
      %s925 = ssub.s32 8192, 8192
      %926 = vsyncadd [#allocation4], %s925
      %s927 = sshll.u32 [#allocation7], 4
      %s928 = int_to_ptr.vmem [resolvable:$true] %s927
      %933 = dma.vmem_to_hbm [thread:$0]  %s928, 8192, %s2, [#allocation4], 128, 128, 8
    $region21: #{tpu_custom_call.1} parent=1 // pred_fallthru
      _
    // Predicated region
    $region22: #{tpu_custom_call.1} parent=1 // pred_check
      _
    $region23: #{tpu_custom_call.1} parent=1 // pred_check_branch
      %935 = sbr.rel (0) target = $region25
    $region24: #{tpu_custom_call.1} parent=1 // pred_region
      %s937 = ssub.s32 32, 32
      %938 = vsyncadd [#allocation9], %s937
      %s940 = sshll.u32 [#allocation8], 4
      %s941 = int_to_ptr.vmem [resolvable:$true] %s940
      %943 = dma.vmem_to_hbm [thread:$0]  %s941, 32, %s3, [#allocation9]
    $region25: #{tpu_custom_call.1} parent=1 // pred_fallthru
      _
    // Predicated region
    $region26: #{tpu_custom_call.1} parent=1 // pred_check
      _
    $region27: #{tpu_custom_call.1} parent=1 // pred_check_branch
      %945 = sbr.rel (0) target = $region29
    $region28: #{tpu_custom_call.1} parent=1 // pred_region
      %946 = dma.done [#allocation4], 8192
    $region29: #{tpu_custom_call.1} parent=1 // pred_fallthru
      _
    // Predicated region
    $region30: #{tpu_custom_call.1} parent=1 // pred_check
      _
    $region31: #{tpu_custom_call.1} parent=1 // pred_check_branch
      %948 = sbr.rel (0) target = $region33
    $region32: #{tpu_custom_call.1} parent=1 // pred_region
      %949 = dma.done [#allocation9], 32
    $region33: #{tpu_custom_call.1} parent=1 // pred_fallthru
      _
    %950 = vsyncpa [#allocation3], 1
    %951 = vsyncpa [#allocation6], 1
    %952 = vsyncpa [#allocation4], 1
    %953 = vsyncpa [#allocation9], 1

</llo_original>
